<compile_context>
chip_gen: v5e
topology: v5e:2x2
jax: 0.10.0
libtpu: 0.0.40
codegen_flags: <defaults>
</compile_context>

<pallas_src>
import math
from functools import partial

import jax
import jax.numpy as jnp
from jax import lax
from jax.experimental import pallas as pl
from jax.experimental.pallas import tpu as pltpu


def _pick_tile(hw_pad: int, cap: int) -> int:
    """Largest multiple-of-128 divisor of hw_pad that is <= cap (min 128)."""
    t = min(cap, hw_pad)
    t -= t % 128
    t = max(t, 128)
    while t > 128 and hw_pad % t != 0:
        t -= 128
    return t


def _vmem_estimate(C, hw_pad, tile_p, tile_q, itemsize, nrays, mm_bytes):
    """Rough per-core VMEM footprint (bytes) of one grid step."""
    return (C * hw_pad * itemsize                 # resident feature map (single buffer)
            + C * tile_p * 4                      # f32 accumulator scratch
            + tile_q * tile_p * 4                 # base iota
            + 2 * tile_q * tile_p * mm_bytes      # live one-hot tiles
            + 2 * nrays * tile_p * 4              # dist blocks (double buffered)
            + 2 * 8 * tile_p * 4                  # grid blocks (sublane padded)
            + 2 * C * tile_p * itemsize           # sampled output blocks
            + 4 * max(2 * nrays, 8) * tile_p * 4  # offsets/coords output blocks
            + (2 << 20))                          # slack for Mosaic internals


def _chunk_bounds(dist_flat, nrays, H, W, hw_pad, tile_p, tile_q):
    """Per-(batch, output-tile) reachable source-chunk bounds, from dist.

    Returns (qlo, qcnt) int32 arrays of shape (B, num_p): first chunk index
    and number of chunks to visit (0 if no valid samples in the tile).
    """
    B = dist_flat.shape[0]
    HW = H * W
    num_p = hw_pad // tile_p
    num_q = hw_pad // tile_q

    angles = jnp.arange(nrays, dtype=jnp.float32) / float(nrays) * (2.0 * math.pi)
    sin_a = jnp.sin(angles).reshape(1, nrays, 1)
    cos_a = jnp.cos(angles).reshape(1, nrays, 1)
    pidx = jnp.arange(HW, dtype=jnp.int32)
    xg = (pidx % W).astype(jnp.float32).reshape(1, 1, HW)
    yg = (pidx // W).astype(jnp.float32).reshape(1, 1, HW)

    cx = cos_a * dist_flat + xg
    cy = sin_a * dist_flat + yg
    ix = jnp.round(cx * (float(W) / float(W - 1)) - 0.5)
    iy = jnp.round(cy * (float(H) / float(H - 1)) - 0.5)
    valid = (ix >= 0) & (ix <= W - 1) & (iy >= 0) & (iy <= H - 1)
    flat = iy.astype(jnp.int32) * W + ix.astype(jnp.int32)

    fmin = jnp.where(valid, flat, HW)
    fmax = jnp.where(valid, flat, -1)
    pad = hw_pad - HW
    if pad:
        fmin = jnp.pad(fmin, ((0, 0), (0, 0), (0, pad)), constant_values=HW)
        fmax = jnp.pad(fmax, ((0, 0), (0, 0), (0, pad)), constant_values=-1)
    fmin = fmin.reshape(B, nrays, num_p, tile_p).min(axis=(1, 3))   # (B, num_p)
    fmax = fmax.reshape(B, nrays, num_p, tile_p).max(axis=(1, 3))

    guard = W + 1   # absorb XLA-vs-Mosaic fp rounding differences (+-1 px in x/y)
    qlo = jnp.clip((fmin - guard) // tile_q, 0, num_q - 1)
    qhi = jnp.clip((fmax + guard) // tile_q, 0, num_q - 1)
    any_valid = fmax >= 0
    qlo = jnp.where(any_valid, qlo, 0).astype(jnp.int32)
    qcnt = jnp.where(any_valid, qhi - qlo + 1, 0).astype(jnp.int32)
    return qlo, qcnt


def _sampling_kernel(qlo_ref, qcnt_ref,                       # scalar prefetch (SMEM)
                     sincos_ref, grid_ref, dist_ref, feat_hbm,  # inputs
                     sampled_ref, offs_ref, coord_ref,          # outputs
                     feat_vmem, acc_ref, copy_sem,              # scratch
                     *, H, W, nrays, nd, tile_p, tile_q, gather_in_bf16):
    """One grid step = one batch element x one tile of output pixels.

    sincos_ref : (nrays, 2)        f32  columns = (sin, cos)
    grid_ref   : (2, tile_p)       f32  flat pixel grid (x, y) for this tile
    dist_ref   : (nrays, tile_p)   f32  radial distances
    feat_hbm   : (B, C, HWp)            feature map, left in HBM (pl.ANY)
    sampled_ref: (C, tile_p)            gathered features (output pixels)
    offs_ref   : (2*nrays, tile_p) f32  normalized offsets (x rows, then y rows)
    coord_ref  : (2*nrays, tile_p) f32  2*offsets - 1 (grid_sample coords)
    feat_vmem  : (C, HWp)               resident feature copy (per batch)
    acc_ref    : (C, tile_p)       f32  gather accumulator
    """
    b = pl.program_id(0)
    p = pl.program_id(1)

    # Single-buffered full-feature residency: one DMA per batch element.
    # (Requires the p axis to be iterated sequentially per core; see
    #  dimension_semantics=("parallel", "arbitrary") in the wrapper.)
    @pl.when(p == 0)
    def _load_features():
        cp = pltpu.make_async_copy(feat_hbm.at[b], feat_vmem, copy_sem.at[0])
        cp.start()
        cp.wait()

    d = dist_ref[...]                       # (nrays, tile_p)
    s = sincos_ref[:, 0:1]                  # (nrays, 1)  sin(angle)
    c = sincos_ref[:, 1:2]                  # (nrays, 1)  cos(angle)
    xg = grid_ref[0:1, :]                   # (1, tile_p)
    yg = grid_ref[1:2, :]                   # (1, tile_p)

    cx = c * d + xg                         # offset_iw + grid_x
    cy = s * d + yg                         # offset_ih + grid_y

    inv_wm1 = 1.0 / float(W - 1)
    inv_hm1 = 1.0 / float(H - 1)
    ox = cx * inv_wm1
    oy = cy * inv_hm1

    # Sublane/lane-dense output layout: rows [0, nrays) = x, [nrays, 2*nrays) = y.
    offs_ref[0:nrays, :] = ox
    offs_ref[nrays:2 * nrays, :] = oy
    coord_ref[0:nrays, :] = ox * 2.0 - 1.0
    coord_ref[nrays:2 * nrays, :] = oy * 2.0 - 1.0

    # grid_sample(align_corners=False, nearest): ix = round(cx*W/(W-1) - 0.5).
    ix = jnp.round(cx * (float(W) / float(W - 1)) - 0.5)
    iy = jnp.round(cy * (float(H) / float(H - 1)) - 0.5)
    # TODO(synk): jnp.round is round-half-even (matches torch CPU nearbyint);
    # torch CUDA grid_sample nearest may differ at exact .5 tie pixels.
    valid = (ix >= 0) & (ix <= W - 1) & (iy >= 0) & (iy <= H - 1)
    flat = jnp.where(valid,
                     iy.astype(jnp.int32) * W + ix.astype(jnp.int32),
                     -1)                    # -1 sentinel never matches a source index

    acc_ref[...] = jnp.zeros_like(acc_ref)
    base_iota = lax.broadcasted_iota(jnp.int32, (tile_q, tile_p), 0)
    # With f32 features the MXU takes the multi-pass f32 path (exact-ish copy);
    # gather_in_bf16 trades bf16 rounding for ~2-3x fewer MXU cycles.
    mm_dtype = jnp.bfloat16 if gather_in_bf16 else feat_vmem.dtype

    def chunk_body(ci, carry):
        q0 = pl.multiple_of(ci * tile_q, tile_q)
        flat_local = flat - q0                                  # (nrays, tile_p)
        for r in range(nrays):                                  # static unroll
            onehot = (base_iota == flat_local[r:r + 1, :]).astype(mm_dtype)
            lhs = feat_vmem[r * nd:(r + 1) * nd, pl.ds(q0, tile_q)]  # (nd, tile_q)
            acc_ref[r * nd:(r + 1) * nd, :] += jnp.dot(
                lhs.astype(mm_dtype), onehot,
                preferred_element_type=jnp.float32)
        return carry

    qlo = qlo_ref[b, p]
    qcnt = qcnt_ref[b, p]
    lax.fori_loop(qlo, qlo + qcnt, chunk_body, 0)

    sampled_ref[...] = acc_ref[...].astype(sampled_ref.dtype)   # one dense store


def sampling_features(feature_map, dist, nrays, nd_sampling, *,
                      max_tile_p=512, max_tile_q=512, gather_in_bf16=False):
    """JAX/Pallas equivalent of SamplingFeatures.forward (nd_sampling > 0).

    Returns (sampled_features, sampling_coord, offsets):
      sampled_features: (B, nrays*nd_sampling, H, W)  == (B, C, H, W)
      sampling_coord:   (nrays*B, H, W, 2)
      offsets:          (B, nrays, 2, H, W)  (normalized, as torch modifies in place)

    max_tile_p / max_tile_q: output-pixel / source-pixel tile caps (multiples
    of 128).  512 is a safe default for all generations; v6e (128 MiB VMEM)
    can raise max_tile_p to 1024-2048 for fewer grid steps.
    """
    B, C, H, W = feature_map.shape
    assert nd_sampling > 0, "only the nd_sampling > 0 branch is implemented"
    # TODO(synk): nd_sampling <= 0 branch (per-ray full-channel sampling) not implemented.
    assert nrays * nd_sampling == C
    assert H > 1 and W > 1, "H, W must be > 1 (division by (H-1)/(W-1))"
    HW = H * W
    hw_pad = ((HW + 127) // 128) * 128          # lane-align the pixel axis

    tile_p = _pick_tile(hw_pad, max_tile_p)
    tile_q = _pick_tile(hw_pad, max_tile_q)

    itemsize = jnp.dtype(feature_map.dtype).itemsize
    mm_bytes = 2 if (gather_in_bf16 or itemsize == 2) else 4
    budget = 44 * 1024 * 1024                   # headroom for v7x (64 MiB VMEM)
    while (_vmem_estimate(C, hw_pad, tile_p, tile_q, itemsize, nrays, mm_bytes)
           > budget and tile_q > 128):
        tile_q = _pick_tile(hw_pad, tile_q - 128)
    while (_vmem_estimate(C, hw_pad, tile_p, tile_q, itemsize, nrays, mm_bytes)
           > budget and tile_p > 128):
        tile_p = _pick_tile(hw_pad, tile_p - 128)
    est = _vmem_estimate(C, hw_pad, tile_p, tile_q, itemsize, nrays, mm_bytes)
    vmem_limit = int(min(max(32 * 1024 * 1024, est + 16 * 1024 * 1024),
                         64 * 1024 * 1024))

    num_p = hw_pad // tile_p

    # Per-ray direction vectors (same formula as the torch module).
    angles = jnp.arange(nrays, dtype=jnp.float32) / float(nrays) * (2.0 * math.pi)
    sincos = jnp.stack([jnp.sin(angles), jnp.cos(angles)], axis=1)   # (nrays, 2)

    # Flat pixel grid, padded pixels pushed far out of bounds (=> invalid).
    pidx = jnp.arange(hw_pad, dtype=jnp.int32)
    in_range = pidx < HW
    xg = jnp.where(in_range, (pidx % W).astype(jnp.float32), -1e6)
    yg = jnp.where(in_range, (pidx // W).astype(jnp.float32), -1e6)
    grid_xy = jnp.stack([xg, yg], axis=0)                            # (2, hw_pad)

    dist_flat = dist.reshape(B, nrays, HW).astype(jnp.float32)
    feat_flat = feature_map.reshape(B, C, HW)

    # Reachable source-chunk bounds per (batch, output tile) -> scalar prefetch.
    qlo, qcnt = _chunk_bounds(dist_flat, nrays, H, W, hw_pad, tile_p, tile_q)

    if hw_pad != HW:
        pad = hw_pad - HW
        dist_flat = jnp.pad(dist_flat, ((0, 0), (0, 0), (0, pad)))
        feat_flat = jnp.pad(feat_flat, ((0, 0), (0, 0), (0, pad)))

    kernel = partial(_sampling_kernel, H=H, W=W, nrays=nrays, nd=nd_sampling,
                     tile_p=tile_p, tile_q=tile_q, gather_in_bf16=gather_in_bf16)

    sampled, offs, coords = pl.pallas_call(
        kernel,
        out_shape=(
            jax.ShapeDtypeStruct((B, C, hw_pad), feature_map.dtype),
            jax.ShapeDtypeStruct((B, 2 * nrays, hw_pad), jnp.float32),
            jax.ShapeDtypeStruct((B, 2 * nrays, hw_pad), jnp.float32),
        ),
        grid_spec=pltpu.PrefetchScalarGridSpec(
            num_scalar_prefetch=2,
            grid=(B, num_p),
            in_specs=[
                pl.BlockSpec((nrays, 2), lambda b, p, ql, qc: (0, 0)),            # sincos
                pl.BlockSpec((2, tile_p), lambda b, p, ql, qc: (0, p)),           # grid_xy
                pl.BlockSpec((None, nrays, tile_p), lambda b, p, ql, qc: (b, 0, p)),  # dist
                pl.BlockSpec(memory_space=pl.ANY),                                # features (HBM)
            ],
            out_specs=[
                pl.BlockSpec((None, C, tile_p), lambda b, p, ql, qc: (b, 0, p)),
                pl.BlockSpec((None, 2 * nrays, tile_p), lambda b, p, ql, qc: (b, 0, p)),
                pl.BlockSpec((None, 2 * nrays, tile_p), lambda b, p, ql, qc: (b, 0, p)),
            ],
            scratch_shapes=[
                pltpu.VMEM((C, hw_pad), feature_map.dtype),   # resident features
                pltpu.VMEM((C, tile_p), jnp.float32),         # gather accumulator
                pltpu.SemaphoreType.DMA((1,)),                # feature-copy semaphore
            ]),
        compiler_params=pltpu.CompilerParams(
            # Shard the batch axis across cores (review: prefer B-sharding so the
            # feature map is not duplicated per core); keep p sequential so the
            # per-batch feature load at p == 0 is valid.
            dimension_semantics=("parallel", "arbitrary"),
            vmem_limit_bytes=vmem_limit),
    )(qlo, qcnt, sincos, grid_xy, dist_flat, feat_flat)

    sampled_features = sampled[:, :, :HW].reshape(B, C, H, W)

    offs4 = offs[:, :, :HW].reshape(B, 2, nrays, H, W)
    offsets = jnp.transpose(offs4, (0, 2, 1, 3, 4))                  # (B, nrays, 2, H, W)

    coords4 = coords[:, :, :HW].reshape(B, 2, nrays, HW)
    sampling_coord = jnp.transpose(coords4, (2, 0, 3, 1)).reshape(
        nrays * B, H, W, 2)

    return sampled_features, sampling_coord, offsets


def _reference(feature_map, dist, nrays, nd):
    """Pure-JAX reference of the torch forward (nearest, align_corners=False)."""
    B, C, H, W = feature_map.shape
    angles = jnp.arange(nrays, dtype=jnp.float32) / float(nrays) * (math.pi * 2.0)
    sin_a = jnp.sin(angles).reshape(1, nrays, 1, 1)
    cos_a = jnp.cos(angles).reshape(1, nrays, 1, 1)
    xg = jnp.arange(W, dtype=jnp.float32).reshape(1, 1, 1, W)
    yg = jnp.arange(H, dtype=jnp.float32).reshape(1, 1, H, 1)
    cx = cos_a * dist + xg
    cy = sin_a * dist + yg
    offsets = jnp.stack([cx / (W - 1), cy / (H - 1)], axis=2)        # (B,nrays,2,H,W)
    coords = jnp.transpose(offsets * 2.0 - 1.0, (1, 0, 3, 4, 2)).reshape(
        nrays * B, H, W, 2)
    ix = jnp.round(cx * (W / (W - 1)) - 0.5)
    iy = jnp.round(cy * (H / (H - 1)) - 0.5)
    valid = (ix >= 0) & (ix <= W - 1) & (iy >= 0) & (iy <= H - 1)
    flat = jnp.where(valid, iy.astype(jnp.int32) * W + ix.astype(jnp.int32), 0)
    feat = feature_map.reshape(B, nrays, nd, H * W)
    gathered = jnp.take_along_axis(feat, flat.reshape(B, nrays, 1, H * W), axis=3)
    gathered = jnp.where(valid.reshape(B, nrays, 1, H * W), gathered, 0.0)
    return gathered.reshape(B, nrays * nd, H, W), coords, offsets


if __name__ == "__main__":
    base_key = jax.random.PRNGKey(0)

    def run_case(case_idx, B, nrays, nd_sampling, H, W, max_tile_p, max_tile_q):
        C = nrays * nd_sampling
        k1, k2 = jax.random.split(jax.random.fold_in(base_key, case_idx))
        feature_map = jax.random.normal(k1, (B, C, H, W), dtype=jnp.float32)
        dist = jax.random.uniform(k2, (B, nrays, H, W), dtype=jnp.float32,
                                  minval=0.0, maxval=5.0)

        sampled, coords, offsets = sampling_features(
            feature_map, dist, nrays, nd_sampling,
            max_tile_p=max_tile_p, max_tile_q=max_tile_q)
        jax.block_until_ready((sampled, coords, offsets))

        ref_s, ref_c, ref_o = _reference(feature_map, dist, nrays, nd_sampling)
        assert sampled.shape == (B, C, H, W)
        assert coords.shape == (nrays * B, H, W, 2)
        assert offsets.shape == (B, nrays, 2, H, W)
        assert jnp.allclose(sampled, ref_s, atol=1e-5), "sampled mismatch"
        assert jnp.allclose(offsets, ref_o, atol=1e-5), "offsets mismatch"
        assert jnp.allclose(coords, ref_c, atol=1e-5), "coords mismatch"

    # Case 1: HW multiple of 128; force small tiles to exercise the multi-tile /
    # multi-chunk (dynamic-bound fori_loop) path.
    run_case(0, B=2, nrays=4, nd_sampling=2, H=16, W=16,
             max_tile_p=128, max_tile_q=128)
    # Case 2: HW not a multiple of 128 -> exercises wrapper-side lane padding.
    run_case(1, B=2, nrays=4, nd_sampling=2, H=10, W=10,
             max_tile_p=512, max_tile_q=512)

    print("KERNEL_OK")
</pallas_src>

<mosaic_0001>
module attributes {stable_mosaic.version = 11 : i64} {
  func.func @_sampling_kernel(%arg0: i32, %arg1: i32, %arg2: memref<2x2xi32, #tpu.memory_space<smem>>, %arg3: memref<2x2xi32, #tpu.memory_space<smem>>, %arg4: memref<4x2xf32, #tpu.memory_space<vmem>>, %arg5: memref<2x128xf32, #tpu.memory_space<vmem>>, %arg6: memref<1x4x128xf32, #tpu.memory_space<vmem>>, %arg7: memref<2x8x256xf32, #tpu.memory_space<any>>, %arg8: memref<1x8x128xf32, #tpu.memory_space<vmem>>, %arg9: memref<1x8x128xf32, #tpu.memory_space<vmem>>, %arg10: memref<1x8x128xf32, #tpu.memory_space<vmem>>, %arg11: memref<8x256xf32, #tpu.memory_space<vmem>>, %arg12: memref<8x128xf32, #tpu.memory_space<vmem>>, %arg13: memref<1x!tpu.dma_semaphore, #tpu.memory_space<semaphore_mem>>) attributes {dimension_semantics = [#tpu.dimension_semantics<parallel>, #tpu.dimension_semantics<arbitrary>], iteration_bounds = array<i64: 2, 2>, scalar_prefetch = 2 : i64, scratch_operands = 3 : i64, tpu.core_type = #tpu.core_type<tc>, window_params = [{pipeline_mode = #tpu.pipeline_mode<synchronous>, transform_indices = @transform_0, window_bounds = array<i64: 4, 2>}, {transform_indices = @transform_1, window_bounds = array<i64: 2, 128>}, {transform_indices = @transform_2, window_bounds = array<i64: 1, 4, 128>}, {}, {transform_indices = @transform_4, window_bounds = array<i64: 1, 8, 128>}, {transform_indices = @transform_5, window_bounds = array<i64: 1, 8, 128>}, {transform_indices = @transform_6, window_bounds = array<i64: 1, 8, 128>}]} {
    %c0_i32 = arith.constant 0 : i32
    %0 = arith.cmpi eq, %arg1, %c0_i32 : i32
    %1 = arith.extui %0 : i1 to i32
    %c0_i32_0 = arith.constant 0 : i32
    %2 = arith.cmpi ne, %1, %c0_i32_0 : i32
    scf.if %2 {
      %c0_i32_43 = arith.constant 0 : i32
      %c0_i32_44 = arith.constant 0 : i32
      %c0_i32_45 = arith.constant 0 : i32
      %85 = tpu.memref_slice %arg7[%arg0, %c0_i32_44, %c0_i32_45] : memref<2x8x256xf32, #tpu.memory_space<any>> -> memref<1x8x256xf32, #tpu.memory_space<any>>
      %86 = tpu.memref_squeeze %85 : memref<1x8x256xf32, #tpu.memory_space<any>> -> memref<8x256xf32, #tpu.memory_space<any>>
      %87 = tpu.memref_slice %arg13[%c0_i32_43] : memref<1x!tpu.dma_semaphore, #tpu.memory_space<semaphore_mem>> -> memref<1x!tpu.dma_semaphore, #tpu.memory_space<semaphore_mem>>
      %88 = tpu.memref_squeeze %87 : memref<1x!tpu.dma_semaphore, #tpu.memory_space<semaphore_mem>> -> memref<!tpu.dma_semaphore, #tpu.memory_space<semaphore_mem>>
      tpu.enqueue_dma source(%86 : memref<8x256xf32, #tpu.memory_space<any>>) target(%arg11 : memref<8x256xf32, #tpu.memory_space<vmem>>) target_semaphore(%88 : memref<!tpu.dma_semaphore, #tpu.memory_space<semaphore_mem>>)
      %c0_i32_46 = arith.constant 0 : i32
      %c0_i32_47 = arith.constant 0 : i32
      %c0_i32_48 = arith.constant 0 : i32
      %89 = tpu.memref_slice %arg7[%arg0, %c0_i32_47, %c0_i32_48] : memref<2x8x256xf32, #tpu.memory_space<any>> -> memref<1x8x256xf32, #tpu.memory_space<any>>
      %90 = tpu.memref_squeeze %89 : memref<1x8x256xf32, #tpu.memory_space<any>> -> memref<8x256xf32, #tpu.memory_space<any>>
      %91 = tpu.memref_slice %arg13[%c0_i32_46] : memref<1x!tpu.dma_semaphore, #tpu.memory_space<semaphore_mem>> -> memref<1x!tpu.dma_semaphore, #tpu.memory_space<semaphore_mem>>
      %92 = tpu.memref_squeeze %91 : memref<1x!tpu.dma_semaphore, #tpu.memory_space<semaphore_mem>> -> memref<!tpu.dma_semaphore, #tpu.memory_space<semaphore_mem>>
      tpu.wait_dma2 semaphore(%92 : memref<!tpu.dma_semaphore, #tpu.memory_space<semaphore_mem>>) src(%90 : memref<8x256xf32, #tpu.memory_space<any>>) dst(%arg11 : memref<8x256xf32, #tpu.memory_space<vmem>>)
    } else {
    }
    %c0 = arith.constant 0 : index
    %c0_1 = arith.constant 0 : index
    %c0_2 = arith.constant 0 : index
    %3 = vector.load %arg6[%c0, %c0_1, %c0_2] : memref<1x4x128xf32, #tpu.memory_space<vmem>>, vector<1x4x128xf32>
    %4 = vector.shape_cast %3 : vector<1x4x128xf32> to vector<4x128xf32>
    %c0_3 = arith.constant 0 : index
    %c0_4 = arith.constant 0 : index
    %5 = vector.load %arg4[%c0_3, %c0_4] : memref<4x2xf32, #tpu.memory_space<vmem>>, vector<4x1xf32>
    %c0_5 = arith.constant 0 : index
    %c1 = arith.constant 1 : index
    %6 = vector.load %arg4[%c0_5, %c1] : memref<4x2xf32, #tpu.memory_space<vmem>>, vector<4x1xf32>
    %c0_6 = arith.constant 0 : index
    %c0_7 = arith.constant 0 : index
    %7 = vector.load %arg5[%c0_6, %c0_7] : memref<2x128xf32, #tpu.memory_space<vmem>>, vector<1x128xf32>
    %c1_8 = arith.constant 1 : index
    %c0_9 = arith.constant 0 : index
    %8 = vector.load %arg5[%c1_8, %c0_9] : memref<2x128xf32, #tpu.memory_space<vmem>>, vector<1x128xf32>
    %9 = vector.broadcast %6 : vector<4x1xf32> to vector<4x128xf32>
    %10 = arith.mulf %9, %4 : vector<4x128xf32>
    %11 = vector.broadcast %7 : vector<1x128xf32> to vector<4x128xf32>
    %12 = arith.addf %10, %11 : vector<4x128xf32>
    %13 = vector.broadcast %5 : vector<4x1xf32> to vector<4x128xf32>
    %14 = arith.mulf %13, %4 : vector<4x128xf32>
    %15 = vector.broadcast %8 : vector<1x128xf32> to vector<4x128xf32>
    %16 = arith.addf %14, %15 : vector<4x128xf32>
    %cst = arith.constant 0.0666666701 : f32
    %17 = vector.broadcast %cst : f32 to vector<4x128xf32>
    %18 = arith.mulf %12, %17 : vector<4x128xf32>
    %cst_10 = arith.constant 0.0666666701 : f32
    %19 = vector.broadcast %cst_10 : f32 to vector<4x128xf32>
    %20 = arith.mulf %16, %19 : vector<4x128xf32>
    %c0_11 = arith.constant 0 : index
    %c0_12 = arith.constant 0 : index
    %c0_13 = arith.constant 0 : index
    %21 = vector.load %arg9[%c0_11, %c0_12, %c0_13] : memref<1x8x128xf32, #tpu.memory_space<vmem>>, vector<1x4x128xf32>
    %22 = vector.shape_cast %21 : vector<1x4x128xf32> to vector<4x128xf32>
    %23 = vector.shape_cast %18 : vector<4x128xf32> to vector<1x4x128xf32>
    tpu.vector_store %arg9[%c0_11, %c0_12, %c0_13], %23 {strides = array<i32>} : memref<1x8x128xf32, #tpu.memory_space<vmem>>, vector<1x4x128xf32>,
    %c0_14 = arith.constant 0 : index
    %c4 = arith.constant 4 : index
    %c0_15 = arith.constant 0 : index
    %24 = vector.load %arg9[%c0_14, %c4, %c0_15] : memref<1x8x128xf32, #tpu.memory_space<vmem>>, vector<1x4x128xf32>
    %25 = vector.shape_cast %24 : vector<1x4x128xf32> to vector<4x128xf32>
    %26 = vector.shape_cast %20 : vector<4x128xf32> to vector<1x4x128xf32>
    tpu.vector_store %arg9[%c0_14, %c4, %c0_15], %26 {strides = array<i32>} : memref<1x8x128xf32, #tpu.memory_space<vmem>>, vector<1x4x128xf32>,
    %cst_16 = arith.constant 2.000000e+00 : f32
    %27 = vector.broadcast %cst_16 : f32 to vector<4x128xf32>
    %28 = arith.mulf %18, %27 : vector<4x128xf32>
    %cst_17 = arith.constant 1.000000e+00 : f32
    %29 = vector.broadcast %cst_17 : f32 to vector<4x128xf32>
    %30 = arith.subf %28, %29 : vector<4x128xf32>
    %c0_18 = arith.constant 0 : index
    %c0_19 = arith.constant 0 : index
    %c0_20 = arith.constant 0 : index
    %31 = vector.load %arg10[%c0_18, %c0_19, %c0_20] : memref<1x8x128xf32, #tpu.memory_space<vmem>>, vector<1x4x128xf32>
    %32 = vector.shape_cast %31 : vector<1x4x128xf32> to vector<4x128xf32>
    %33 = vector.shape_cast %30 : vector<4x128xf32> to vector<1x4x128xf32>
    tpu.vector_store %arg10[%c0_18, %c0_19, %c0_20], %33 {strides = array<i32>} : memref<1x8x128xf32, #tpu.memory_space<vmem>>, vector<1x4x128xf32>,
    %cst_21 = arith.constant 2.000000e+00 : f32
    %34 = vector.broadcast %cst_21 : f32 to vector<4x128xf32>
    %35 = arith.mulf %20, %34 : vector<4x128xf32>
    %cst_22 = arith.constant 1.000000e+00 : f32
    %36 = vector.broadcast %cst_22 : f32 to vector<4x128xf32>
    %37 = arith.subf %35, %36 : vector<4x128xf32>
    %c0_23 = arith.constant 0 : index
    %c4_24 = arith.constant 4 : index
    %c0_25 = arith.constant 0 : index
    %38 = vector.load %arg10[%c0_23, %c4_24, %c0_25] : memref<1x8x128xf32, #tpu.memory_space<vmem>>, vector<1x4x128xf32>
    %39 = vector.shape_cast %38 : vector<1x4x128xf32> to vector<4x128xf32>
    %40 = vector.shape_cast %37 : vector<4x128xf32> to vector<1x4x128xf32>
    tpu.vector_store %arg10[%c0_23, %c4_24, %c0_25], %40 {strides = array<i32>} : memref<1x8x128xf32, #tpu.memory_space<vmem>>, vector<1x4x128xf32>,
    %cst_26 = arith.constant 1.06666672 : f32
    %41 = vector.broadcast %cst_26 : f32 to vector<4x128xf32>
    %42 = arith.mulf %12, %41 : vector<4x128xf32>
    %cst_27 = arith.constant 5.000000e-01 : f32
    %43 = vector.broadcast %cst_27 : f32 to vector<4x128xf32>
    %44 = arith.subf %42, %43 : vector<4x128xf32>
    %45 = math.roundeven %44 : vector<4x128xf32>
    %cst_28 = arith.constant 1.06666672 : f32
    %46 = vector.broadcast %cst_28 : f32 to vector<4x128xf32>
    %47 = arith.mulf %16, %46 : vector<4x128xf32>
    %cst_29 = arith.constant 5.000000e-01 : f32
    %48 = vector.broadcast %cst_29 : f32 to vector<4x128xf32>
    %49 = arith.subf %47, %48 : vector<4x128xf32>
    %50 = math.roundeven %49 : vector<4x128xf32>
    %cst_30 = arith.constant 0.000000e+00 : f32
    %51 = vector.broadcast %cst_30 : f32 to vector<4x128xf32>
    %52 = arith.cmpf oge, %45, %51 : vector<4x128xf32>
    %cst_31 = arith.constant 1.500000e+01 : f32
    %53 = vector.broadcast %cst_31 : f32 to vector<4x128xf32>
    %54 = arith.cmpf ole, %45, %53 : vector<4x128xf32>
    %55 = arith.andi %52, %54 : vector<4x128xi1>
    %cst_32 = arith.constant 0.000000e+00 : f32
    %56 = vector.broadcast %cst_32 : f32 to vector<4x128xf32>
    %57 = arith.cmpf oge, %50, %56 : vector<4x128xf32>
    %58 = arith.andi %55, %57 : vector<4x128xi1>
    %cst_33 = arith.constant 1.500000e+01 : f32
    %59 = vector.broadcast %cst_33 : f32 to vector<4x128xf32>
    %60 = arith.cmpf ole, %50, %59 : vector<4x128xf32>
    %61 = arith.andi %58, %60 : vector<4x128xi1>
    %62 = arith.fptosi %50 : vector<4x128xf32> to vector<4x128xi32>
    %c16_i32 = arith.constant 16 : i32
    %63 = vector.broadcast %c16_i32 : i32 to vector<4x128xi32>
    %64 = arith.muli %62, %63 : vector<4x128xi32>
    %65 = arith.fptosi %45 : vector<4x128xf32> to vector<4x128xi32>
    %66 = arith.addi %64, %65 : vector<4x128xi32>
    %c-1_i32 = arith.constant -1 : i32
    %67 = vector.broadcast %c-1_i32 : i32 to vector<4x128xi32>
    %68 = arith.select %61, %66, %67 : vector<4x128xi1>, vector<4x128xi32>
    %cst_34 = arith.constant 0.000000e+00 : f32
    %69 = vector.broadcast %cst_34 : f32 to vector<8x128xf32>
    %c0_35 = arith.constant 0 : index
    %c0_36 = arith.constant 0 : index
    %70 = vector.load %arg12[%c0_35, %c0_36] : memref<8x128xf32, #tpu.memory_space<vmem>>, vector<8x128xf32>
    tpu.vector_store %arg12[%c0_35, %c0_36], %69 {strides = array<i32>} : memref<8x128xf32, #tpu.memory_space<vmem>>, vector<8x128xf32>,
    %71 = tpu.iota {dimensions = array<i32: 0>} : vector<128x128xi32>
    %72 = arith.index_cast %arg0 : i32 to index
    %73 = arith.index_cast %arg1 : i32 to index
    %74 = memref.load %arg2[%72, %73] : memref<2x2xi32, #tpu.memory_space<smem>>
    %75 = arith.index_cast %arg0 : i32 to index
    %76 = arith.index_cast %arg1 : i32 to index
    %77 = memref.load %arg3[%75, %76] : memref<2x2xi32, #tpu.memory_space<smem>>
    %78 = arith.addi %74, %77 : i32
    %c0_i32_37 = arith.constant 0 : i32
    %79 = arith.subi %78, %74 : i32
    %80 = arith.addi %74, %79 : i32
    %c1_i32 = arith.constant 1 : i32
    scf.for %arg14 = %74 to %80 step %c1_i32  : i32 {
      %c128_i32 = arith.constant 128 : i32
      %85 = arith.muli %arg14, %c128_i32 : i32
      %86 = tpu.assume_multiple %85, 128 : i32
      %87 = vector.broadcast %86 : i32 to vector<4x128xi32>
      %88 = arith.subi %68, %87 : vector<4x128xi32>
      %89 = vector.extract_strided_slice %88 {offsets = [0, 0], sizes = [1, 128], strides = [1, 1]} : vector<4x128xi32> to vector<1x128xi32>
      %90 = vector.broadcast %89 : vector<1x128xi32> to vector<128x128xi32>
      %91 = arith.cmpi eq, %71, %90 : vector<128x128xi32>
      %92 = arith.extui %91 : vector<128x128xi1> to vector<128x128xi32>
      %93 = arith.sitofp %92 : vector<128x128xi32> to vector<128x128xf32>
      %c0_43 = arith.constant 0 : index
      %94 = arith.index_cast %86 : i32 to index
      %95 = vector.load %arg11[%c0_43, %94] : memref<8x256xf32, #tpu.memory_space<vmem>>, vector<2x128xf32>
      %c0_44 = arith.constant 0 : index
      %c0_45 = arith.constant 0 : index
      %96 = vector.load %arg12[%c0_44, %c0_45] : memref<8x128xf32, #tpu.memory_space<vmem>>, vector<2x128xf32>
      %cst_46 = arith.constant dense<0.000000e+00> : vector<2x128xf32>
      %97 = tpu.matmul %95, %93, %cst_46 {dimension_numbers = #tpu.dot_dimension_numbers<[1], [0], [0], [1], [0, 0, 1, 1], [], []>} : vector<2x128xf32>, vector<128x128xf32>, vector<2x128xf32> -> vector<2x128xf32>
      %98 = arith.addf %96, %97 : vector<2x128xf32>
      %c0_47 = arith.constant 0 : index
      %c0_48 = arith.constant 0 : index
      %99 = vector.load %arg12[%c0_47, %c0_48] : memref<8x128xf32, #tpu.memory_space<vmem>>, vector<2x128xf32>
      tpu.vector_store %arg12[%c0_47, %c0_48], %98 {strides = array<i32>} : memref<8x128xf32, #tpu.memory_space<vmem>>, vector<2x128xf32>,
      %100 = vector.extract_strided_slice %88 {offsets = [1, 0], sizes = [1, 128], strides = [1, 1]} : vector<4x128xi32> to vector<1x128xi32>
      %101 = vector.broadcast %100 : vector<1x128xi32> to vector<128x128xi32>
      %102 = arith.cmpi eq, %71, %101 : vector<128x128xi32>
      %103 = arith.extui %102 : vector<128x128xi1> to vector<128x128xi32>
      %104 = arith.sitofp %103 : vector<128x128xi32> to vector<128x128xf32>
      %c2 = arith.constant 2 : index
      %105 = arith.index_cast %86 : i32 to index
      %106 = vector.load %arg11[%c2, %105] : memref<8x256xf32, #tpu.memory_space<vmem>>, vector<2x128xf32>
      %c2_49 = arith.constant 2 : index
      %c0_50 = arith.constant 0 : index
      %107 = vector.load %arg12[%c2_49, %c0_50] : memref<8x128xf32, #tpu.memory_space<vmem>>, vector<2x128xf32>
      %cst_51 = arith.constant dense<0.000000e+00> : vector<2x128xf32>
      %108 = tpu.matmul %106, %104, %cst_51 {dimension_numbers = #tpu.dot_dimension_numbers<[1], [0], [0], [1], [0, 0, 1, 1], [], []>} : vector<2x128xf32>, vector<128x128xf32>, vector<2x128xf32> -> vector<2x128xf32>
      %109 = arith.addf %107, %108 : vector<2x128xf32>
      %c2_52 = arith.constant 2 : index
      %c0_53 = arith.constant 0 : index
      %110 = vector.load %arg12[%c2_52, %c0_53] : memref<8x128xf32, #tpu.memory_space<vmem>>, vector<2x128xf32>
      tpu.vector_store %arg12[%c2_52, %c0_53], %109 {strides = array<i32>} : memref<8x128xf32, #tpu.memory_space<vmem>>, vector<2x128xf32>,
      %111 = vector.extract_strided_slice %88 {offsets = [2, 0], sizes = [1, 128], strides = [1, 1]} : vector<4x128xi32> to vector<1x128xi32>
      %112 = vector.broadcast %111 : vector<1x128xi32> to vector<128x128xi32>
      %113 = arith.cmpi eq, %71, %112 : vector<128x128xi32>
      %114 = arith.extui %113 : vector<128x128xi1> to vector<128x128xi32>
      %115 = arith.sitofp %114 : vector<128x128xi32> to vector<128x128xf32>
      %c4_54 = arith.constant 4 : index
      %116 = arith.index_cast %86 : i32 to index
      %117 = vector.load %arg11[%c4_54, %116] : memref<8x256xf32, #tpu.memory_space<vmem>>, vector<2x128xf32>
      %c4_55 = arith.constant 4 : index
      %c0_56 = arith.constant 0 : index
      %118 = vector.load %arg12[%c4_55, %c0_56] : memref<8x128xf32, #tpu.memory_space<vmem>>, vector<2x128xf32>
      %cst_57 = arith.constant dense<0.000000e+00> : vector<2x128xf32>
      %119 = tpu.matmul %117, %115, %cst_57 {dimension_numbers = #tpu.dot_dimension_numbers<[1], [0], [0], [1], [0, 0, 1, 1], [], []>} : vector<2x128xf32>, vector<128x128xf32>, vector<2x128xf32> -> vector<2x128xf32>
      %120 = arith.addf %118, %119 : vector<2x128xf32>
      %c4_58 = arith.constant 4 : index
      %c0_59 = arith.constant 0 : index
      %121 = vector.load %arg12[%c4_58, %c0_59] : memref<8x128xf32, #tpu.memory_space<vmem>>, vector<2x128xf32>
      tpu.vector_store %arg12[%c4_58, %c0_59], %120 {strides = array<i32>} : memref<8x128xf32, #tpu.memory_space<vmem>>, vector<2x128xf32>,
      %122 = vector.extract_strided_slice %88 {offsets = [3, 0], sizes = [1, 128], strides = [1, 1]} : vector<4x128xi32> to vector<1x128xi32>
      %123 = vector.broadcast %122 : vector<1x128xi32> to vector<128x128xi32>
      %124 = arith.cmpi eq, %71, %123 : vector<128x128xi32>
      %125 = arith.extui %124 : vector<128x128xi1> to vector<128x128xi32>
      %126 = arith.sitofp %125 : vector<128x128xi32> to vector<128x128xf32>
      %c6 = arith.constant 6 : index
      %127 = arith.index_cast %86 : i32 to index
      %128 = vector.load %arg11[%c6, %127] : memref<8x256xf32, #tpu.memory_space<vmem>>, vector<2x128xf32>
      %c6_60 = arith.constant 6 : index
      %c0_61 = arith.constant 0 : index
      %129 = vector.load %arg12[%c6_60, %c0_61] : memref<8x128xf32, #tpu.memory_space<vmem>>, vector<2x128xf32>
      %cst_62 = arith.constant dense<0.000000e+00> : vector<2x128xf32>
      %130 = tpu.matmul %128, %126, %cst_62 {dimension_numbers = #tpu.dot_dimension_numbers<[1], [0], [0], [1], [0, 0, 1, 1], [], []>} : vector<2x128xf32>, vector<128x128xf32>, vector<2x128xf32> -> vector<2x128xf32>
      %131 = arith.addf %129, %130 : vector<2x128xf32>
      %c6_63 = arith.constant 6 : index
      %c0_64 = arith.constant 0 : index
      %132 = vector.load %arg12[%c6_63, %c0_64] : memref<8x128xf32, #tpu.memory_space<vmem>>, vector<2x128xf32>
      tpu.vector_store %arg12[%c6_63, %c0_64], %131 {strides = array<i32>} : memref<8x128xf32, #tpu.memory_space<vmem>>, vector<2x128xf32>,
    }
    %c0_38 = arith.constant 0 : index
    %c0_39 = arith.constant 0 : index
    %81 = vector.load %arg12[%c0_38, %c0_39] : memref<8x128xf32, #tpu.memory_space<vmem>>, vector<8x128xf32>
    %c0_40 = arith.constant 0 : index
    %c0_41 = arith.constant 0 : index
    %c0_42 = arith.constant 0 : index
    %82 = vector.load %arg8[%c0_40, %c0_41, %c0_42] : memref<1x8x128xf32, #tpu.memory_space<vmem>>, vector<1x8x128xf32>
    %83 = vector.shape_cast %82 : vector<1x8x128xf32> to vector<8x128xf32>
    %84 = vector.shape_cast %81 : vector<8x128xf32> to vector<1x8x128xf32>
    tpu.vector_store %arg8[%c0_40, %c0_41, %c0_42], %84 {strides = array<i32>} : memref<1x8x128xf32, #tpu.memory_space<vmem>>, vector<1x8x128xf32>,
    return
  }
  func.func @transform_0(%arg0: i32, %arg1: i32, %arg2: memref<2x2xi32, #tpu.memory_space<smem>>, %arg3: memref<2x2xi32, #tpu.memory_space<smem>>) -> (i32, i32) {
    %c0_i32 = arith.constant 0 : i32
    %c0_i32_0 = arith.constant 0 : i32
    %c0_i32_1 = arith.constant 0 : i32
    return %c0_i32, %c0_i32_0 : i32, i32
  }
  func.func @transform_1(%arg0: i32, %arg1: i32, %arg2: memref<2x2xi32, #tpu.memory_space<smem>>, %arg3: memref<2x2xi32, #tpu.memory_space<smem>>) -> (i32, i32) {
    %c0_i32 = arith.constant 0 : i32
    %c0_i32_0 = arith.constant 0 : i32
    return %c0_i32, %arg1 : i32, i32
  }
  func.func @transform_2(%arg0: i32, %arg1: i32, %arg2: memref<2x2xi32, #tpu.memory_space<smem>>, %arg3: memref<2x2xi32, #tpu.memory_space<smem>>) -> (i32, i32, i32) {
    %c0_i32 = arith.constant 0 : i32
    %c0_i32_0 = arith.constant 0 : i32
    return %arg0, %c0_i32, %arg1 : i32, i32, i32
  }
  func.func @transform_4(%arg0: i32, %arg1: i32, %arg2: memref<2x2xi32, #tpu.memory_space<smem>>, %arg3: memref<2x2xi32, #tpu.memory_space<smem>>) -> (i32, i32, i32) {
    %c0_i32 = arith.constant 0 : i32
    %c0_i32_0 = arith.constant 0 : i32
    return %arg0, %c0_i32, %arg1 : i32, i32, i32
  }
  func.func @transform_5(%arg0: i32, %arg1: i32, %arg2: memref<2x2xi32, #tpu.memory_space<smem>>, %arg3: memref<2x2xi32, #tpu.memory_space<smem>>) -> (i32, i32, i32) {
    %c0_i32 = arith.constant 0 : i32
    %c0_i32_0 = arith.constant 0 : i32
    return %arg0, %c0_i32, %arg1 : i32, i32, i32
  }
  func.func @transform_6(%arg0: i32, %arg1: i32, %arg2: memref<2x2xi32, #tpu.memory_space<smem>>, %arg3: memref<2x2xi32, #tpu.memory_space<smem>>) -> (i32, i32, i32) {
    %c0_i32 = arith.constant 0 : i32
    %c0_i32_0 = arith.constant 0 : i32
    return %arg0, %c0_i32, %arg1 : i32, i32, i32
  }
}

</mosaic_0001>

<llo_original>
// kernel: tpu_custom_call.1
$region0: #{tpu_custom_call.1}
  #allocation0 [shape = 'u32[]', space=smem, size = 0x4, offset = 0x4, fixed_abs, tag = 'smem constant byte address 0x4 - core index']
  #allocation1 [shape = 'u32[72,128]{1,0:T(1,128)}', space=vmem, size = 0x9000, scoped, tag = 'internal scratch']
  #allocation2 [shape = 'f32[8,256]{1,0:T(8,128)}', space=vmem, size = 0x2000, scoped, tag = 'scratch operand']
  #allocation3 [shape = 'f32[8,128]{1,0:T(8,128)}', space=vmem, size = 0x1000, scoped, tag = 'scratch operand']
  #allocation4 [shape = 's32[1]{0}', space=sflag, size = 0x4, scoped, tag = 'scratch operand']
  #allocation5 [shape = 's32[1]{0}', space=sflag, size = 0x4, scoped, tag = 'scoped memory for tpu_custom_call.1']
  #allocation6 [shape = 'u8[1024]{0}', space=smem, size = 0x400, scoped, tag = 'prefetched SMEM operand 0']
  #allocation7 [shape = 'u8[1024]{0}', space=smem, size = 0x400, scoped, tag = 'prefetched SMEM operand 1']
  #allocation15 [shape = 's32[]', space=sflag, size = 0x4, offset = 0, fixed_abs, tag = 'sflag constant byte address 0x0 - dummy sync flag']
  #allocation16 [shape = 's32[]', space=sflag, size = 0x4, offset = 0, fixed_abs, tag = 'sflag constant byte address 0x0 - dummy sync flag']
  #allocation17 [shape = 'u32[]', space=smem, size = 0x4, offset = 0x44, fixed_abs, tag = 'smem constant byte address 0x44 - assertion arg 0']
  #allocation18 [shape = 'u32[]', space=smem, size = 0x4, offset = 0x48, fixed_abs, tag = 'smem constant byte address 0x48 - assertion arg 1']
  %s0 = inlined_call_operand.vmem [shape: s32[2,2], index: 0, kind: input, shape index: {}]
  %s1 = inlined_call_operand.hbm [shape: s32[2,2], index: 1, kind: input, shape index: {}]
  %s2 = inlined_call_operand.vmem [shape: f32[4,2], index: 2, kind: input, shape index: {}]
  %s3 = inlined_call_operand.vmem [shape: f32[2,256], index: 3, kind: input, shape index: {}]
  %s4 = inlined_call_operand.hbm [shape: f32[2,4,256], index: 4, kind: input, shape index: {}]
  %s5 = inlined_call_operand.hbm [shape: f32[2,8,256], index: 5, kind: input, shape index: {}]
  %s6 = inlined_call_operand.hbm [shape: f32[2,8,256], index: 6, kind: output, shape index: {0}]
  %s7 = inlined_call_operand.hbm [shape: f32[2,8,256], index: 7, kind: output, shape index: {1}]
  %s8 = inlined_call_operand.hbm [shape: f32[2,8,256], index: 8, kind: output, shape index: {2}]
  %9 = xla_tuple %s6, %s7, %s8
  %s10 = sld [smem:[#allocation0]]
  $region80: #{tpu_custom_call.1} parent=0
    _
  %s12 = ssub.s32 1, %s10
  %s13 = scalar_select 0, %s12, %s10
  %s15 = sshll.u32 %s0, 4
  %s16 = int_to_ptr.vmem [resolvable:$true] %s15
  %18 = dma.vmem_to_smem %s16, 32, [#allocation6], [#allocation5]
  %s20 = sshll.u32 %s1, 4
  %s21 = int_to_ptr.hbm [resolvable:$true] %s20
  %23 = dma.hbm_to_smem %s21, 32, [#allocation7], [#allocation5]
  %25 = dma.done [#allocation5], 64
  %26 = sfence
  $region1: #{tpu_custom_call.1} parent=0
    #allocation8 [shape = 'u8[4096]{0}', space=vmem, size = 0x1000, scoped, tag = 'input window, operand 4']
    #allocation9 [shape = 's32[2]{0}', space=sflag, size = 0x8, scoped, tag = 'scoped memory for tpu_custom_call.1']
    #allocation10 [shape = 's32[2]{0}', space=sflag, size = 0x8, scoped, tag = 'scoped memory for tpu_custom_call.1']
    #allocation11 [shape = 'u8[8192]{0}', space=vmem, size = 0x2000, scoped, tag = 'output window, operand 0']
    #allocation12 [shape = 'u8[8192]{0}', space=vmem, size = 0x2000, scoped, tag = 'output window, operand 1']
    #allocation13 [shape = 's32[2]{0}', space=sflag, size = 0x8, scoped, tag = 'scoped memory for tpu_custom_call.1']
    #allocation14 [shape = 'u8[8192]{0}', space=vmem, size = 0x2000, scoped, tag = 'output window, operand 2']
    %27 = vsyncpa [#allocation9], 0
    %s28 = scalar_lea.sflag [#allocation9], 1
    %29 = vsyncpa %s28, 0
    %30 = vsyncpa [#allocation10], 0
    %s31 = scalar_lea.sflag [#allocation10], 1
    %32 = vsyncpa %s31, 0
    %33 = vsyncpa [#allocation13], 0
    %s34 = scalar_lea.sflag [#allocation13], 1
    %35 = vsyncpa %s34, 0
    loop: start=0, step=1, limit=6
    $region2: #{tpu_custom_call.1} parent=1 // loop_pre_header
      _
    $region3: #{tpu_custom_call.1} parent=1 // loop_header
      %s37 = sphi 0, %s41
      %p38 = scmp.ge.s32.totalorder %s37, 6
      %s44 = sphi 0, %s56
      %s45 = sphi 0, %s52
      %s46 = sphi 0, %s44
      %s47 = sphi 0, %s45
      %s48 = sphi 0, %s46
      %s49 = sphi 0, %s47
      %s57 = sphi 0, %s57
      %s59 = sphi 0, %s57
      %s60 = sphi 0, %s59
      %s74 = sphi 0, %s60
      %s80 = sphi 0, %s82
      %s83 = sphi 0, %s80
      %s84 = sphi 0, %s83
      %s100 = sphi 0, %s84
      %s108 = sphi 0, %s110
      %s111 = sphi 0, %s108
      %s112 = sphi 0, %s111
      %s128 = sphi 0, %s112
      %s136 = sphi 0, %s138
      %s139 = sphi 0, %s136
      %s140 = sphi 0, %s139
      %s156 = sphi 0, %s140
      %s164 = sphi 0, %s166
      %s167 = sphi 0, %s164
      %s168 = sphi 0, %s167
      %s184 = sphi 0, %s168
      %s192 = sphi 0, %s194
      %s195 = sphi 0, %s192
      %s196 = sphi 0, %s195
      %s212 = sphi 0, %s196
    $region4: #{tpu_custom_call.1} parent=1 // loop_header_branch
      %40 = sbr.rel (%p38) target = $region8
    $region5: #{tpu_custom_call.1} parent=1 // loop_body
      %s42 = ssub.s32 %s37, 1
      %s43 = ssub.s32 %s37, 2
      %s50 = sadd.s32 1, %s45
      %p51 = scmp.ge.s32.totalorder %s50, 2
      %s52 = scalar_select %p51, 0, %s50
      %s53 = sadd.s32 1, %s44
      %s54 = scalar_select %p51, %s53, %s44
      %p55 = scmp.ge.s32.totalorder %s54, 2
      %s56 = scalar_select %p55, 0, %s54
      %s58 = sadd.s32 %s57, 1
      %p61 = scmp.eq.s32.totalorder %s37, 3
      %p62 = scmp.ne.s32.totalorder %s57, %s59
      %p63 = scmp.eq.s32.totalorder %s37, 0
      %p64 = por %p62, %p63
      %p65 = scmp.ne.s32.totalorder %s57, %s59
      %p66 = scmp.eq.s32.totalorder %s42, 3
      %p67 = por %p65, %p66
      %p68 = scmp.ne.s32.totalorder %s59, %s60
      %p69 = scmp.eq.s32.totalorder %s42, 0
      %p70 = por %p68, %p69
      %p71 = scmp.ne.s32.totalorder %s59, %s60
      %p72 = scmp.eq.s32.totalorder %s43, 3
      %p73 = por %p71, %p72
      %p75 = scmp.ne.s32.totalorder %s60, %s74
      %p76 = scmp.eq.s32.totalorder %s43, 0
      %p77 = por %p75, %p76
      %s78 = ssub.s32 %s45, %s52
      %p79 = scmp.eq.s32.totalorder %s78, 0
      %s81 = sadd.s32 %s80, 1
      %s82 = scalar_select %p79, %s80, %s81
      %p85 = pneg %p79
      %p86 = scmp.eq.s32.totalorder %s37, 3
      %p87 = por %p85, %p86
      %p88 = scmp.ne.s32.totalorder %s80, %s83
      %p89 = scmp.eq.s32.totalorder %s37, 0
      %p90 = por %p88, %p89
      %p91 = scmp.ne.s32.totalorder %s80, %s83
      %p92 = scmp.eq.s32.totalorder %s42, 3
      %p93 = por %p91, %p92
      %p94 = scmp.ne.s32.totalorder %s83, %s84
      %p95 = scmp.eq.s32.totalorder %s42, 0
      %p96 = por %p94, %p95
      %p97 = scmp.ne.s32.totalorder %s83, %s84
      %p98 = scmp.eq.s32.totalorder %s43, 3
      %p99 = por %p97, %p98
      %p101 = scmp.ne.s32.totalorder %s84, %s100
      %p102 = scmp.eq.s32.totalorder %s43, 0
      %p103 = por %p101, %p102
      %s104 = ssub.s32 %s44, %s56
      %s105 = ssub.s32 %s45, %s52
      %s106 = sor.u32 %s104, %s105
      %p107 = scmp.eq.s32.totalorder %s106, 0
      %s109 = sadd.s32 %s108, 1
      %s110 = scalar_select %p107, %s108, %s109
      %p113 = pneg %p107
      %p114 = scmp.eq.s32.totalorder %s37, 3
      %p115 = por %p113, %p114
      %p116 = scmp.ne.s32.totalorder %s108, %s111
      %p117 = scmp.eq.s32.totalorder %s37, 0
      %p118 = por %p116, %p117
      %p119 = scmp.ne.s32.totalorder %s108, %s111
      %p120 = scmp.eq.s32.totalorder %s42, 3
      %p121 = por %p119, %p120
      %p122 = scmp.ne.s32.totalorder %s111, %s112
      %p123 = scmp.eq.s32.totalorder %s42, 0
      %p124 = por %p122, %p123
      %p125 = scmp.ne.s32.totalorder %s111, %s112
      %p126 = scmp.eq.s32.totalorder %s43, 3
      %p127 = por %p125, %p126
      %p129 = scmp.ne.s32.totalorder %s112, %s128
      %p130 = scmp.eq.s32.totalorder %s43, 0
      %p131 = por %p129, %p130
      %s132 = ssub.s32 %s44, %s56
      %s133 = ssub.s32 %s45, %s52
      %s134 = sor.u32 %s132, %s133
      %p135 = scmp.eq.s32.totalorder %s134, 0
      %s137 = sadd.s32 %s136, 1
      %s138 = scalar_select %p135, %s136, %s137
      %p141 = pneg %p135
      %p142 = scmp.eq.s32.totalorder %s37, 3
      %p143 = por %p141, %p142
      %p144 = scmp.ne.s32.totalorder %s136, %s139
      %p145 = scmp.eq.s32.totalorder %s37, 0
      %p146 = por %p144, %p145
      %p147 = scmp.ne.s32.totalorder %s136, %s139
      %p148 = scmp.eq.s32.totalorder %s42, 3
      %p149 = por %p147, %p148
      %p150 = scmp.ne.s32.totalorder %s139, %s140
      %p151 = scmp.eq.s32.totalorder %s42, 0
      %p152 = por %p150, %p151
      %p153 = scmp.ne.s32.totalorder %s139, %s140
      %p154 = scmp.eq.s32.totalorder %s43, 3
      %p155 = por %p153, %p154
      %p157 = scmp.ne.s32.totalorder %s140, %s156
      %p158 = scmp.eq.s32.totalorder %s43, 0
      %p159 = por %p157, %p158
      %s160 = ssub.s32 %s44, %s56
      %s161 = ssub.s32 %s45, %s52
      %s162 = sor.u32 %s160, %s161
      %p163 = scmp.eq.s32.totalorder %s162, 0
      %s165 = sadd.s32 %s164, 1
      %s166 = scalar_select %p163, %s164, %s165
      %p169 = pneg %p163
      %p170 = scmp.eq.s32.totalorder %s37, 3
      %p171 = por %p169, %p170
      %p172 = scmp.ne.s32.totalorder %s164, %s167
      %p173 = scmp.eq.s32.totalorder %s37, 0
      %p174 = por %p172, %p173
      %p175 = scmp.ne.s32.totalorder %s164, %s167
      %p176 = scmp.eq.s32.totalorder %s42, 3
      %p177 = por %p175, %p176
      %p178 = scmp.ne.s32.totalorder %s167, %s168
      %p179 = scmp.eq.s32.totalorder %s42, 0
      %p180 = por %p178, %p179
      %p181 = scmp.ne.s32.totalorder %s167, %s168
      %p182 = scmp.eq.s32.totalorder %s43, 3
      %p183 = por %p181, %p182
      %p185 = scmp.ne.s32.totalorder %s168, %s184
      %p186 = scmp.eq.s32.totalorder %s43, 0
      %p187 = por %p185, %p186
      %s188 = ssub.s32 %s44, %s56
      %s189 = ssub.s32 %s45, %s52
      %s190 = sor.u32 %s188, %s189
      %p191 = scmp.eq.s32.totalorder %s190, 0
      %s193 = sadd.s32 %s192, 1
      %s194 = scalar_select %p191, %s192, %s193
      %p197 = pneg %p191
      %p198 = scmp.eq.s32.totalorder %s37, 3
      %p199 = por %p197, %p198
      %p200 = scmp.ne.s32.totalorder %s192, %s195
      %p201 = scmp.eq.s32.totalorder %s37, 0
      %p202 = por %p200, %p201
      %p203 = scmp.ne.s32.totalorder %s192, %s195
      %p204 = scmp.eq.s32.totalorder %s42, 3
      %p205 = por %p203, %p204
      %p206 = scmp.ne.s32.totalorder %s195, %s196
      %p207 = scmp.eq.s32.totalorder %s42, 0
      %p208 = por %p206, %p207
      %p209 = scmp.ne.s32.totalorder %s195, %s196
      %p210 = scmp.eq.s32.totalorder %s43, 3
      %p211 = por %p209, %p210
      %p213 = scmp.ne.s32.totalorder %s196, %s212
      %p214 = scmp.eq.s32.totalorder %s43, 0
      %p215 = por %p213, %p214
      %p216 = scmp.le.s32.totalorder 1, %s37
      %p217 = scmp.lt.s32.totalorder %s37, 5
      %p218 = pnand %p216, %p217
      %p219 = pneg %p218
      // Predicated region
      $region9: #{tpu_custom_call.1} parent=5 // pred_check
        _
      $region10: #{tpu_custom_call.1} parent=5 // pred_check_branch
        %221 = sbr.rel (%p218) target = $region12
      $region11: #{tpu_custom_call.1} parent=5 // pred_region
        %s222 = ssub.s32 %s37, 1
        // Predicated region
        $region13: #{tpu_custom_call.1} parent=11 // pred_check
          %p223 = pneg %p70
        $region14: #{tpu_custom_call.1} parent=11 // pred_check_branch
          %225 = sbr.rel (%p223) target = $region16
        $region15: #{tpu_custom_call.1} parent=11 // pred_region
          _
        $region16: #{tpu_custom_call.1} parent=11 // pred_fallthru
          _
      $region12: #{tpu_custom_call.1} parent=5 // pred_fallthru
        _
      %p226 = scmp.lt.s32.totalorder %s37, 4
      // Predicated region
      $region17: #{tpu_custom_call.1} parent=5 // pred_check
        %p227 = pneg %p226
      $region18: #{tpu_custom_call.1} parent=5 // pred_check_branch
        %229 = sbr.rel (%p227) target = $region20
      $region19: #{tpu_custom_call.1} parent=5 // pred_region
        // Predicated region
        $region21: #{tpu_custom_call.1} parent=19 // pred_check
          %p230 = pneg %p90
        $region22: #{tpu_custom_call.1} parent=19 // pred_check_branch
          %232 = sbr.rel (%p230) target = $region24
        $region23: #{tpu_custom_call.1} parent=19 // pred_region
          %p233 = scmp.lt.s32.totalorder %s45, 1
          %s234 = scalar_select %p233, %s45, 1
          %s235 = smul.addr %s234, 2
          %s236 = scalar_lea.vmem %s3, %s235
        $region24: #{tpu_custom_call.1} parent=19 // pred_fallthru
          _
        // Predicated region
        $region25: #{tpu_custom_call.1} parent=19 // pred_check
          %p237 = pneg %p118
        $region26: #{tpu_custom_call.1} parent=19 // pred_check_branch
          %239 = sbr.rel (%p237) target = $region28
        $region27: #{tpu_custom_call.1} parent=19 // pred_region
          %s240 = sand.u32 %s108, 1
          %s241 = scalar_lea.sflag [#allocation9], %s240
          %s242 = sand.u32 %s108, 1
          %s243 = smul.addr %s242, 4
          %s244 = scalar_lea.vmem [#allocation8], %s243
          %246 = vsyncadd %s241, 0
          %s247 = smul.addr %s44, 2
          %s248 = sadd.s32 %s45, %s247
          %s249 = smul.addr %s248, 4
          %s250 = scalar_lea.hbm %s4, %s249
          %s252 = sshll.u32 %s250, 4
          %s253 = int_to_ptr.hbm [resolvable:$true] %s252
          %s254 = sshll.u32 %s244, 4
          %s255 = int_to_ptr.vmem [resolvable:$true] %s254
          %257 = dma.hbm_to_vmem [thread:$0]  %s253, 64, %s255, %s241
        $region28: #{tpu_custom_call.1} parent=19 // pred_fallthru
          _
      $region20: #{tpu_custom_call.1} parent=5 // pred_fallthru
        _
      %p258 = scmp.le.s32.totalorder 1, %s37
      %p259 = scmp.lt.s32.totalorder %s37, 5
      %p260 = pnand %p258, %p259
      %p261 = pneg %p260
      // Predicated region
      $region29: #{tpu_custom_call.1} parent=5 // pred_check
        _
      $region30: #{tpu_custom_call.1} parent=5 // pred_check_branch
        %263 = sbr.rel (%p260) target = $region32
      $region31: #{tpu_custom_call.1} parent=5 // pred_region
        %s264 = ssub.s32 %s37, 1
        %s265 = sand.u32 %s111, 1
        %s266 = scalar_lea.sflag [#allocation9], %s265
        %s267 = sand.u32 %s111, 1
        %s268 = smul.addr %s267, 4
        %s269 = scalar_lea.vmem [#allocation8], %s268
        // Predicated region
        $region33: #{tpu_custom_call.1} parent=31 // pred_check
          %p270 = pneg %p124
        $region34: #{tpu_custom_call.1} parent=31 // pred_check_branch
          %272 = sbr.rel (%p270) target = $region36
        $region35: #{tpu_custom_call.1} parent=31 // pred_region
          %274 = dma.done %s266, 64
        $region36: #{tpu_custom_call.1} parent=31 // pred_fallthru
          _
        %p275 = pneg %p70
        %p276 = pneg %p67
        %p277 = scmp.lt.s32.totalorder %s47, 1
        %s278 = scalar_select %p277, %s47, 1
        %s279 = smul.addr %s278, 2
        %s280 = scalar_lea.vmem %s3, %s279
        %p281 = pneg %p96
        %p282 = pneg %p93
        %s283 = sand.u32 %s111, 1
        %s284 = scalar_lea.sflag [#allocation9], %s283
        %s285 = sand.u32 %s111, 1
        %s286 = smul.addr %s285, 4
        %s287 = scalar_lea.vmem [#allocation8], %s286
        %p288 = pneg %p124
        %p289 = pneg %p121
        %p290 = pneg %p152
        %p291 = pneg %p149
        %s292 = sand.u32 %s139, 1
        %s293 = scalar_lea.sflag [#allocation10], %s292
        %s294 = sand.u32 %s139, 1
        %s295 = smul.addr %s294, 8
        %s296 = scalar_lea.vmem [#allocation11], %s295
        %p297 = pneg %p180
        %p298 = pneg %p177
        %s299 = sand.u32 %s42, 1
        %s300 = scalar_lea.sflag [#allocation13], %s299
        %s301 = sand.u32 %s167, 1
        %s302 = smul.addr %s301, 8
        %s303 = scalar_lea.vmem [#allocation12], %s302
        %p304 = pneg %p208
        %p305 = pneg %p205
        %s306 = sand.u32 %s42, 1
        %s307 = scalar_lea.sflag [#allocation13], %s306
        %s308 = sand.u32 %s195, 1
        %s309 = smul.addr %s308, 8
        %s310 = scalar_lea.vmem [#allocation14], %s309
        %p311 = scmp.lt.s32.totalorder %s47, 1
        %s312 = scalar_select %p311, %s47, 1
        %s313 = smul.addr %s312, 2
        %s314 = scalar_lea.vmem %s3, %s313
        %p315 = scmp.eq.s32.totalorder %s47, 0
        // Predicated region
        $region37: #{tpu_custom_call.1} parent=31 // pred_check
          %p316 = pneg %p315
        $region38: #{tpu_custom_call.1} parent=31 // pred_check_branch
          %318 = sbr.rel (%p316) target = $region40
        $region39: #{tpu_custom_call.1} parent=31 // pred_region
          %s319 = smul.u32 %s46, 2
          %s320 = smul.addr %s319, 8
          %s321 = scalar_lea.hbm %s5, %s320
          // Predicated region
          $region41: #{tpu_custom_call.1} parent=39 // pred_check
            _
          $region42: #{tpu_custom_call.1} parent=39 // pred_check_branch
            %323 = sbr.rel target = $region44
          $region43: #{tpu_custom_call.1} parent=39 // pred_region
            %324 = sst [smem:[#allocation17]] [#allocation16]
            %325 = sst [smem:[#allocation18]] [#allocation15]
          $region44: #{tpu_custom_call.1} parent=39 // pred_fallthru
            _
          %327 = shalt.err (0)
          %s329 = sshll.u32 %s321, 4
          %s330 = int_to_ptr.hbm [resolvable:$true] %s329
          %s331 = sshll.u32 [#allocation2], 4
          %s332 = int_to_ptr.vmem [resolvable:$true] %s331
          %334 = dma.hbm_to_vmem [thread:$0]  %s330, 256, %s332, [#allocation4]
          %s335 = smul.u32 8, 1
          %s336 = smul.u32 %s335, 2
          %s337 = sshll.u32 %s336, 4
          %338 = dma.done [#allocation4], %s337
        $region40: #{tpu_custom_call.1} parent=31 // pred_fallthru
          _
        %v339 = vld [vmem:[%s269] sm:$0xf]
        %v340 = vld [vmem:[%s2] sm:$0xf]
        %v341 = vld [vmem:[%s314] sm:$0x1]
        %v342 = vld [vmem:[%s314 + $0x1] sm:$0x1]
        %344 = vset.pattern.permute.xlu0 1
        %345 = vperm.xlu0 %344, %v340
        %v346 = vpop.permute.xlu0 %345
        %v348 = vmul.f32 %v346, %v339
        %v349 = vperm.slane %v341, 0
        %v350 = vadd.f32 %v348, %v349
        %351 = vset.pattern.permute.xlu0 0
        %352 = vperm.xlu0 %351, %v340
        %v353 = vpop.permute.xlu0 %352
        %v355 = vmul.f32 %v353, %v339
        %v356 = vperm.slane %v342, 0
        %v357 = vadd.f32 %v355, %v356
        %v358 = vmul.f32 %v350, 0.06666667
        %v359 = vmul.f32 %v357, 0.06666667
        %360 = vst [vmem:[%s303] sm:$0xf] %v358
        %361 = vst [vmem:[%s303 + $0x4] sm:$0xf] %v359
        %v362 = vmul.f32 %v358, 2.0
        %v363 = vsub.f32 %v362, 1.0
        %364 = vst [vmem:[%s310] sm:$0xf] %v363
        %v365 = vmul.f32 %v359, 2.0
        %v366 = vsub.f32 %v365, 1.0
        %367 = vst [vmem:[%s310 + $0x4] sm:$0xf] %v366
        %v368 = vmul.f32 %v350, 1.0666667
        %v369 = vsub.f32 %v368, 0.5
        %v370 = vround.ne.pseudo %v369
        %v371 = vmul.f32 %v357, 1.0666667
        %v372 = vsub.f32 %v371, 0.5
        %v373 = vround.ne.pseudo %v372
        %vm374 = vcmp.ge.f32.partialorder %v370, 0.0
        %vm375 = vcmp.le.f32.partialorder %v370, 15.0
        %vm376 = vmand %vm374, %vm375
        %vm377 = vcmp.ge.f32.partialorder %v373, 0.0
        %vm378 = vmand %vm376, %vm377
        %vm379 = vcmp.le.f32.partialorder %v373, 15.0
        %vm380 = vmand %vm378, %vm379
        %v381 = vcvt.f32.s32.ties.to.even %v372
        %v382 = vmul.u32 %v381, 16
        %v383 = vcvt.f32.s32.ties.to.even %v369
        %v384 = vadd.s32 %v382, %v383
        %v385 = vsel %vm380, %v384, 4294967295
        %386 = vst [vmem:[#allocation3] sm:$0xff] 0.0
        %v387 = vlaneseq
        %v388 = vshrl.u32 %v387, 7
        %v389 = vadd.s32 %v388, 8
        %v390 = vadd.s32 %v388, 16
        %v391 = vadd.s32 %v388, 24
        %v392 = vadd.s32 %v388, 32
        %v393 = vadd.s32 %v388, 40
        %v394 = vadd.s32 %v388, 48
        %v395 = vadd.s32 %v388, 56
        %v396 = vadd.s32 %v388, 64
        %v397 = vadd.s32 %v388, 72
        %v398 = vadd.s32 %v388, 80
        %v399 = vadd.s32 %v388, 88
        %v400 = vadd.s32 %v388, 96
        %v401 = vadd.s32 %v388, 104
        %v402 = vadd.s32 %v388, 112
        %v403 = vadd.s32 %v388, 120
        %s404 = sshra.s32 %s47, 7
        %s405 = sand.u32 %s47, 127
        %s406 = sadd.s32 %s404, %s46
        %s407 = smul.u32 %s406, 128
        %s408 = sshra.s32 %s47, 7
        %s409 = sand.u32 %s47, 127
        %s410 = sadd.s32 %s407, %s409
        %s411 = sld [smem:[#allocation6 + %s410]]
        %s412 = sld [smem:[#allocation7 + %s410]]
        %s413 = sadd.s32 %s411, %s412
        // While loop
        $region45: #{tpu_custom_call.1} parent=31 // loop_pre_header
          _
        $region46: #{tpu_custom_call.1} parent=31 // loop_header
          %s415 = sphi %s411, %s417
          %p416 = scmp.ge.s32.totalorder %s415, %s413
        $region47: #{tpu_custom_call.1} parent=31 // loop_header_branch
          %419 = sbr.rel (%p416) target = $region51
        $region48: #{tpu_custom_call.1} parent=31 // loop_body
          %s420 = smul.u32 %s415, 128
          %v421 = vstv %s420
          %v422 = vsub.s32 %v385, %v421
          %v423 = vperm.slane %v422, 0
          %vm424 = vcmp.eq.s32.totalorder %v388, %v423
          %vm425 = vcmp.eq.s32.totalorder %v389, %v423
          %vm426 = vcmp.eq.s32.totalorder %v390, %v423
          %vm427 = vcmp.eq.s32.totalorder %v391, %v423
          %vm428 = vcmp.eq.s32.totalorder %v392, %v423
          %vm429 = vcmp.eq.s32.totalorder %v393, %v423
          %vm430 = vcmp.eq.s32.totalorder %v394, %v423
          %vm431 = vcmp.eq.s32.totalorder %v395, %v423
          %vm432 = vcmp.eq.s32.totalorder %v396, %v423
          %vm433 = vcmp.eq.s32.totalorder %v397, %v423
          %vm434 = vcmp.eq.s32.totalorder %v398, %v423
          %vm435 = vcmp.eq.s32.totalorder %v399, %v423
          %vm436 = vcmp.eq.s32.totalorder %v400, %v423
          %vm437 = vcmp.eq.s32.totalorder %v401, %v423
          %vm438 = vcmp.eq.s32.totalorder %v402, %v423
          %vm439 = vcmp.eq.s32.totalorder %v403, %v423
          %v440 = vsel %vm424, 1, 0
          %v441 = vsel %vm425, 1, 0
          %v442 = vsel %vm426, 1, 0
          %v443 = vsel %vm427, 1, 0
          %v444 = vsel %vm428, 1, 0
          %v445 = vsel %vm429, 1, 0
          %v446 = vsel %vm430, 1, 0
          %v447 = vsel %vm431, 1, 0
          %v448 = vsel %vm432, 1, 0
          %v449 = vsel %vm433, 1, 0
          %v450 = vsel %vm434, 1, 0
          %v451 = vsel %vm435, 1, 0
          %v452 = vsel %vm436, 1, 0
          %v453 = vsel %vm437, 1, 0
          %v454 = vsel %vm438, 1, 0
          %v455 = vsel %vm439, 1, 0
          %v456 = vcvt.s32.f32 %v440
          %v457 = vcvt.s32.f32 %v441
          %v458 = vcvt.s32.f32 %v442
          %v459 = vcvt.s32.f32 %v443
          %v460 = vcvt.s32.f32 %v444
          %v461 = vcvt.s32.f32 %v445
          %v462 = vcvt.s32.f32 %v446
          %v463 = vcvt.s32.f32 %v447
          %v464 = vcvt.s32.f32 %v448
          %v465 = vcvt.s32.f32 %v449
          %v466 = vcvt.s32.f32 %v450
          %v467 = vcvt.s32.f32 %v451
          %v468 = vcvt.s32.f32 %v452
          %v469 = vcvt.s32.f32 %v453
          %v470 = vcvt.s32.f32 %v454
          %v471 = vcvt.s32.f32 %v455
          %s472 = sshra.s32 %s420, 7
          %s473 = sand.u32 %s420, 127
          %s474 = smul.addr %s472, 8
          %s475 = scalar_lea.vmem [#allocation2], %s474
          %v476 = vld [vmem:[%s475] sm:$0x3]
          %v477 = vld [vmem:[#allocation3] sm:$0x3]
          %478 = vmatpush.msra.mxu0 %v471
          %479 = vmatpush.msra.mxu0 %v470
          %480 = vmatpush.msra.mxu0 %v469
          %481 = vmatpush.msra.mxu0 %v468
          %482 = vmatpush.msra.mxu0 %v467
          %483 = vmatpush.msra.mxu0 %v466
          %484 = vmatpush.msra.mxu0 %v465
          %485 = vmatpush.msra.mxu0 %v464
          %486 = vmatpush.msra.mxu0 %v463
          %487 = vmatpush.msra.mxu0 %v462
          %488 = vmatpush.msra.mxu0 %v461
          %489 = vmatpush.msra.mxu0 %v460
          %490 = vmatpush.msra.mxu0 %v459
          %491 = vmatpush.msra.mxu0 %v458
          %492 = vmatpush.msra.mxu0 %v457
          %493 = vmatpush.msra.mxu0 %v456
          %494 = vmatmul.f32.gmra.mxu0 %v476
          %v495 = vpop.f32.mrf.mxu0
          %v496 = vadd.f32 0.0, %v495
          %497 = vdwg.mxu0
          %v498 = vadd.f32 %v477, %v496
          %499 = vst [vmem:[#allocation3] sm:$0x3] %v498
          %v500 = vperm.slane %v422, 1
          %vm501 = vcmp.eq.s32.totalorder %v388, %v500
          %vm502 = vcmp.eq.s32.totalorder %v389, %v500
          %vm503 = vcmp.eq.s32.totalorder %v390, %v500
          %vm504 = vcmp.eq.s32.totalorder %v391, %v500
          %vm505 = vcmp.eq.s32.totalorder %v392, %v500
          %vm506 = vcmp.eq.s32.totalorder %v393, %v500
          %vm507 = vcmp.eq.s32.totalorder %v394, %v500
          %vm508 = vcmp.eq.s32.totalorder %v395, %v500
          %vm509 = vcmp.eq.s32.totalorder %v396, %v500
          %vm510 = vcmp.eq.s32.totalorder %v397, %v500
          %vm511 = vcmp.eq.s32.totalorder %v398, %v500
          %vm512 = vcmp.eq.s32.totalorder %v399, %v500
          %vm513 = vcmp.eq.s32.totalorder %v400, %v500
          %vm514 = vcmp.eq.s32.totalorder %v401, %v500
          %vm515 = vcmp.eq.s32.totalorder %v402, %v500
          %vm516 = vcmp.eq.s32.totalorder %v403, %v500
          %v517 = vsel %vm501, 1, 0
          %v518 = vsel %vm502, 1, 0
          %v519 = vsel %vm503, 1, 0
          %v520 = vsel %vm504, 1, 0
          %v521 = vsel %vm505, 1, 0
          %v522 = vsel %vm506, 1, 0
          %v523 = vsel %vm507, 1, 0
          %v524 = vsel %vm508, 1, 0
          %v525 = vsel %vm509, 1, 0
          %v526 = vsel %vm510, 1, 0
          %v527 = vsel %vm511, 1, 0
          %v528 = vsel %vm512, 1, 0
          %v529 = vsel %vm513, 1, 0
          %v530 = vsel %vm514, 1, 0
          %v531 = vsel %vm515, 1, 0
          %v532 = vsel %vm516, 1, 0
          %v533 = vcvt.s32.f32 %v517
          %v534 = vcvt.s32.f32 %v518
          %v535 = vcvt.s32.f32 %v519
          %v536 = vcvt.s32.f32 %v520
          %v537 = vcvt.s32.f32 %v521
          %v538 = vcvt.s32.f32 %v522
          %v539 = vcvt.s32.f32 %v523
          %v540 = vcvt.s32.f32 %v524
          %v541 = vcvt.s32.f32 %v525
          %v542 = vcvt.s32.f32 %v526
          %v543 = vcvt.s32.f32 %v527
          %v544 = vcvt.s32.f32 %v528
          %v545 = vcvt.s32.f32 %v529
          %v546 = vcvt.s32.f32 %v530
          %v547 = vcvt.s32.f32 %v531
          %v548 = vcvt.s32.f32 %v532
          %v549 = vld [vmem:[%s475] sm:$0xc]
          %v550 = vld [vmem:[#allocation3 + $0x2] sm:$0x3]
          %v552 = vrot.slane %v549, 2
          %554 = vmatpush.msra.mxu0 %v548
          %555 = vmatpush.msra.mxu0 %v547
          %556 = vmatpush.msra.mxu0 %v546
          %557 = vmatpush.msra.mxu0 %v545
          %558 = vmatpush.msra.mxu0 %v544
          %559 = vmatpush.msra.mxu0 %v543
          %560 = vmatpush.msra.mxu0 %v542
          %561 = vmatpush.msra.mxu0 %v541
          %562 = vmatpush.msra.mxu0 %v540
          %563 = vmatpush.msra.mxu0 %v539
          %564 = vmatpush.msra.mxu0 %v538
          %565 = vmatpush.msra.mxu0 %v537
          %566 = vmatpush.msra.mxu0 %v536
          %567 = vmatpush.msra.mxu0 %v535
          %568 = vmatpush.msra.mxu0 %v534
          %569 = vmatpush.msra.mxu0 %v533
          %570 = vmatmul.f32.gmra.mxu0 %v552
          %v571 = vpop.f32.mrf.mxu0
          %v572 = vadd.f32 0.0, %v571
          %573 = vdwg.mxu0
          %v574 = vadd.f32 %v550, %v572
          %575 = vst [vmem:[#allocation3 + $0x2] sm:$0x3] %v574
          %v576 = vperm.slane %v422, 2
          %vm577 = vcmp.eq.s32.totalorder %v388, %v576
          %vm578 = vcmp.eq.s32.totalorder %v389, %v576
          %vm579 = vcmp.eq.s32.totalorder %v390, %v576
          %vm580 = vcmp.eq.s32.totalorder %v391, %v576
          %vm581 = vcmp.eq.s32.totalorder %v392, %v576
          %vm582 = vcmp.eq.s32.totalorder %v393, %v576
          %vm583 = vcmp.eq.s32.totalorder %v394, %v576
          %vm584 = vcmp.eq.s32.totalorder %v395, %v576
          %vm585 = vcmp.eq.s32.totalorder %v396, %v576
          %vm586 = vcmp.eq.s32.totalorder %v397, %v576
          %vm587 = vcmp.eq.s32.totalorder %v398, %v576
          %vm588 = vcmp.eq.s32.totalorder %v399, %v576
          %vm589 = vcmp.eq.s32.totalorder %v400, %v576
          %vm590 = vcmp.eq.s32.totalorder %v401, %v576
          %vm591 = vcmp.eq.s32.totalorder %v402, %v576
          %vm592 = vcmp.eq.s32.totalorder %v403, %v576
          %v593 = vsel %vm577, 1, 0
          %v594 = vsel %vm578, 1, 0
          %v595 = vsel %vm579, 1, 0
          %v596 = vsel %vm580, 1, 0
          %v597 = vsel %vm581, 1, 0
          %v598 = vsel %vm582, 1, 0
          %v599 = vsel %vm583, 1, 0
          %v600 = vsel %vm584, 1, 0
          %v601 = vsel %vm585, 1, 0
          %v602 = vsel %vm586, 1, 0
          %v603 = vsel %vm587, 1, 0
          %v604 = vsel %vm588, 1, 0
          %v605 = vsel %vm589, 1, 0
          %v606 = vsel %vm590, 1, 0
          %v607 = vsel %vm591, 1, 0
          %v608 = vsel %vm592, 1, 0
          %v609 = vcvt.s32.f32 %v593
          %v610 = vcvt.s32.f32 %v594
          %v611 = vcvt.s32.f32 %v595
          %v612 = vcvt.s32.f32 %v596
          %v613 = vcvt.s32.f32 %v597
          %v614 = vcvt.s32.f32 %v598
          %v615 = vcvt.s32.f32 %v599
          %v616 = vcvt.s32.f32 %v600
          %v617 = vcvt.s32.f32 %v601
          %v618 = vcvt.s32.f32 %v602
          %v619 = vcvt.s32.f32 %v603
          %v620 = vcvt.s32.f32 %v604
          %v621 = vcvt.s32.f32 %v605
          %v622 = vcvt.s32.f32 %v606
          %v623 = vcvt.s32.f32 %v607
          %v624 = vcvt.s32.f32 %v608
          %v625 = vld [vmem:[%s475] sm:$0x30]
          %v626 = vld [vmem:[#allocation3 + $0x4] sm:$0x3]
          %v628 = vrot.slane %v625, 4
          %630 = vmatpush.msra.mxu0 %v624
          %631 = vmatpush.msra.mxu0 %v623
          %632 = vmatpush.msra.mxu0 %v622
          %633 = vmatpush.msra.mxu0 %v621
          %634 = vmatpush.msra.mxu0 %v620
          %635 = vmatpush.msra.mxu0 %v619
          %636 = vmatpush.msra.mxu0 %v618
          %637 = vmatpush.msra.mxu0 %v617
          %638 = vmatpush.msra.mxu0 %v616
          %639 = vmatpush.msra.mxu0 %v615
          %640 = vmatpush.msra.mxu0 %v614
          %641 = vmatpush.msra.mxu0 %v613
          %642 = vmatpush.msra.mxu0 %v612
          %643 = vmatpush.msra.mxu0 %v611
          %644 = vmatpush.msra.mxu0 %v610
          %645 = vmatpush.msra.mxu0 %v609
          %646 = vmatmul.f32.gmra.mxu0 %v628
          %v647 = vpop.f32.mrf.mxu0
          %v648 = vadd.f32 0.0, %v647
          %649 = vdwg.mxu0
          %v650 = vadd.f32 %v626, %v648
          %651 = vst [vmem:[#allocation3 + $0x4] sm:$0x3] %v650
          %v652 = vperm.slane %v422, 3
          %vm653 = vcmp.eq.s32.totalorder %v388, %v652
          %vm654 = vcmp.eq.s32.totalorder %v389, %v652
          %vm655 = vcmp.eq.s32.totalorder %v390, %v652
          %vm656 = vcmp.eq.s32.totalorder %v391, %v652
          %vm657 = vcmp.eq.s32.totalorder %v392, %v652
          %vm658 = vcmp.eq.s32.totalorder %v393, %v652
          %vm659 = vcmp.eq.s32.totalorder %v394, %v652
          %vm660 = vcmp.eq.s32.totalorder %v395, %v652
          %vm661 = vcmp.eq.s32.totalorder %v396, %v652
          %vm662 = vcmp.eq.s32.totalorder %v397, %v652
          %vm663 = vcmp.eq.s32.totalorder %v398, %v652
          %vm664 = vcmp.eq.s32.totalorder %v399, %v652
          %vm665 = vcmp.eq.s32.totalorder %v400, %v652
          %vm666 = vcmp.eq.s32.totalorder %v401, %v652
          %vm667 = vcmp.eq.s32.totalorder %v402, %v652
          %vm668 = vcmp.eq.s32.totalorder %v403, %v652
          %v669 = vsel %vm653, 1, 0
          %v670 = vsel %vm654, 1, 0
          %v671 = vsel %vm655, 1, 0
          %v672 = vsel %vm656, 1, 0
          %v673 = vsel %vm657, 1, 0
          %v674 = vsel %vm658, 1, 0
          %v675 = vsel %vm659, 1, 0
          %v676 = vsel %vm660, 1, 0
          %v677 = vsel %vm661, 1, 0
          %v678 = vsel %vm662, 1, 0
          %v679 = vsel %vm663, 1, 0
          %v680 = vsel %vm664, 1, 0
          %v681 = vsel %vm665, 1, 0
          %v682 = vsel %vm666, 1, 0
          %v683 = vsel %vm667, 1, 0
          %v684 = vsel %vm668, 1, 0
          %v685 = vcvt.s32.f32 %v669
          %v686 = vcvt.s32.f32 %v670
          %v687 = vcvt.s32.f32 %v671
          %v688 = vcvt.s32.f32 %v672
          %v689 = vcvt.s32.f32 %v673
          %v690 = vcvt.s32.f32 %v674
          %v691 = vcvt.s32.f32 %v675
          %v692 = vcvt.s32.f32 %v676
          %v693 = vcvt.s32.f32 %v677
          %v694 = vcvt.s32.f32 %v678
          %v695 = vcvt.s32.f32 %v679
          %v696 = vcvt.s32.f32 %v680
          %v697 = vcvt.s32.f32 %v681
          %v698 = vcvt.s32.f32 %v682
          %v699 = vcvt.s32.f32 %v683
          %v700 = vcvt.s32.f32 %v684
          %v701 = vld [vmem:[%s475] sm:$0xc0]
          %v702 = vld [vmem:[#allocation3 + $0x6] sm:$0x3]
          %v704 = vrot.slane %v701, 6
          %706 = vmatpush.msra.mxu0 %v700
          %707 = vmatpush.msra.mxu0 %v699
          %708 = vmatpush.msra.mxu0 %v698
          %709 = vmatpush.msra.mxu0 %v697
          %710 = vmatpush.msra.mxu0 %v696
          %711 = vmatpush.msra.mxu0 %v695
          %712 = vmatpush.msra.mxu0 %v694
          %713 = vmatpush.msra.mxu0 %v693
          %714 = vmatpush.msra.mxu0 %v692
          %715 = vmatpush.msra.mxu0 %v691
          %716 = vmatpush.msra.mxu0 %v690
          %717 = vmatpush.msra.mxu0 %v689
          %718 = vmatpush.msra.mxu0 %v688
          %719 = vmatpush.msra.mxu0 %v687
          %720 = vmatpush.msra.mxu0 %v686
          %721 = vmatpush.msra.mxu0 %v685
          %722 = vmatmul.f32.gmra.mxu0 %v704
          %v723 = vpop.f32.mrf.mxu0
          %v724 = vadd.f32 0.0, %v723
          %725 = vdwg.mxu0
          %v726 = vadd.f32 %v702, %v724
          %727 = vst [vmem:[#allocation3 + $0x6] sm:$0x3] %v726
        $region49: #{tpu_custom_call.1} parent=31 // loop_footer
          %s417 = sadd.s32 %s415, 1
        $region50: #{tpu_custom_call.1} parent=31 // loop_footer_branch
          %414 = sbr.rel target = $region46
        $region51: #{tpu_custom_call.1} parent=31 // loop_exit
          _
        %v728 = vld [vmem:[#allocation3] sm:$0xff]
        %729 = vst [vmem:[%s296] sm:$0xff] %v728
        %s730 = sand.u32 %s139, 1
        %s731 = scalar_lea.sflag [#allocation10], %s730
        %s732 = sand.u32 %s139, 1
        %s733 = smul.addr %s732, 8
        %s734 = scalar_lea.vmem [#allocation11], %s733
        %s735 = sand.u32 %s42, 1
        %s736 = scalar_lea.sflag [#allocation13], %s735
        %s737 = sand.u32 %s167, 1
        %s738 = smul.addr %s737, 8
        %s739 = scalar_lea.vmem [#allocation12], %s738
        %s740 = sand.u32 %s42, 1
        %s741 = scalar_lea.sflag [#allocation13], %s740
        %s742 = sand.u32 %s195, 1
        %s743 = smul.addr %s742, 8
        %s744 = scalar_lea.vmem [#allocation14], %s743
        // Predicated region
        $region52: #{tpu_custom_call.1} parent=31 // pred_check
          %p745 = pneg %p149
        $region53: #{tpu_custom_call.1} parent=31 // pred_check_branch
          %747 = sbr.rel (%p745) target = $region55
        $region54: #{tpu_custom_call.1} parent=31 // pred_region
          %749 = vsyncadd %s731, 0
          %s750 = smul.addr %s46, 2
          %s751 = sadd.s32 %s47, %s750
          %s752 = smul.addr %s751, 8
          %s753 = scalar_lea.hbm %s6, %s752
          %s755 = sshll.u32 %s734, 4
          %s756 = int_to_ptr.vmem [resolvable:$true] %s755
          %s757 = sshll.u32 %s753, 4
          %s758 = int_to_ptr.hbm [resolvable:$true] %s757
          %760 = dma.vmem_to_hbm [thread:$0]  %s756, 128, %s758, %s731
        $region55: #{tpu_custom_call.1} parent=31 // pred_fallthru
          _
        // Predicated region
        $region56: #{tpu_custom_call.1} parent=31 // pred_check
          %p761 = pneg %p177
        $region57: #{tpu_custom_call.1} parent=31 // pred_check_branch
          %763 = sbr.rel (%p761) target = $region59
        $region58: #{tpu_custom_call.1} parent=31 // pred_region
          %765 = vsyncadd %s736, 0
          %s766 = smul.addr %s46, 2
          %s767 = sadd.s32 %s47, %s766
          %s768 = smul.addr %s767, 8
          %s769 = scalar_lea.hbm %s7, %s768
          %s771 = sshll.u32 %s739, 4
          %s772 = int_to_ptr.vmem [resolvable:$true] %s771
          %s773 = sshll.u32 %s769, 4
          %s774 = int_to_ptr.hbm [resolvable:$true] %s773
          %776 = dma.vmem_to_hbm [thread:$0]  %s772, 128, %s774, %s736
        $region59: #{tpu_custom_call.1} parent=31 // pred_fallthru
          _
        // Predicated region
        $region60: #{tpu_custom_call.1} parent=31 // pred_check
          %p777 = pneg %p205
        $region61: #{tpu_custom_call.1} parent=31 // pred_check_branch
          %779 = sbr.rel (%p777) target = $region63
        $region62: #{tpu_custom_call.1} parent=31 // pred_region
          %781 = vsyncadd %s741, 0
          %s782 = smul.addr %s46, 2
          %s783 = sadd.s32 %s47, %s782
          %s784 = smul.addr %s783, 8
          %s785 = scalar_lea.hbm %s8, %s784
          %s787 = sshll.u32 %s744, 4
          %s788 = int_to_ptr.vmem [resolvable:$true] %s787
          %s789 = sshll.u32 %s785, 4
          %s790 = int_to_ptr.hbm [resolvable:$true] %s789
          %792 = dma.vmem_to_hbm [thread:$0]  %s788, 128, %s790, %s741
        $region63: #{tpu_custom_call.1} parent=31 // pred_fallthru
          _
      $region32: #{tpu_custom_call.1} parent=5 // pred_fallthru
        _
      %p793 = scmp.le.s32.totalorder 2, %s37
      // Predicated region
      $region64: #{tpu_custom_call.1} parent=5 // pred_check
        %p794 = pneg %p793
      $region65: #{tpu_custom_call.1} parent=5 // pred_check_branch
        %796 = sbr.rel (%p794) target = $region67
      $region66: #{tpu_custom_call.1} parent=5 // pred_region
        %s797 = ssub.s32 %s37, 2
        // Predicated region
        $region68: #{tpu_custom_call.1} parent=66 // pred_check
          %p798 = pneg %p155
        $region69: #{tpu_custom_call.1} parent=66 // pred_check_branch
          %800 = sbr.rel (%p798) target = $region71
        $region70: #{tpu_custom_call.1} parent=66 // pred_region
          %s801 = sand.u32 %s140, 1
          %s802 = scalar_lea.sflag [#allocation10], %s801
          %s803 = sand.u32 %s140, 1
          %s804 = smul.addr %s803, 8
          %s805 = scalar_lea.vmem [#allocation11], %s804
          %807 = dma.done %s802, 128
        $region71: #{tpu_custom_call.1} parent=66 // pred_fallthru
          _
        // Predicated region
        $region72: #{tpu_custom_call.1} parent=66 // pred_check
          %p808 = pneg %p183
        $region73: #{tpu_custom_call.1} parent=66 // pred_check_branch
          %810 = sbr.rel (%p808) target = $region75
        $region74: #{tpu_custom_call.1} parent=66 // pred_region
          %s811 = sand.u32 %s43, 1
          %s812 = scalar_lea.sflag [#allocation13], %s811
          %s813 = sand.u32 %s168, 1
          %s814 = smul.addr %s813, 8
          %s815 = scalar_lea.vmem [#allocation12], %s814
          %817 = dma.done %s812, 128
        $region75: #{tpu_custom_call.1} parent=66 // pred_fallthru
          _
        // Predicated region
        $region76: #{tpu_custom_call.1} parent=66 // pred_check
          %p818 = pneg %p211
        $region77: #{tpu_custom_call.1} parent=66 // pred_check_branch
          %820 = sbr.rel (%p818) target = $region79
        $region78: #{tpu_custom_call.1} parent=66 // pred_region
          %s821 = sand.u32 %s43, 1
          %s822 = scalar_lea.sflag [#allocation13], %s821
          %s823 = sand.u32 %s196, 1
          %s824 = smul.addr %s823, 8
          %s825 = scalar_lea.vmem [#allocation14], %s824
          %827 = dma.done %s822, 128
        $region79: #{tpu_custom_call.1} parent=66 // pred_fallthru
          _
      $region67: #{tpu_custom_call.1} parent=5 // pred_fallthru
        _
    $region6: #{tpu_custom_call.1} parent=1 // loop_footer
      %s41 = sadd.s32 1, %s37
    $region7: #{tpu_custom_call.1} parent=1 // loop_footer_branch
      %36 = sbr.rel target = $region3
    $region8: #{tpu_custom_call.1} parent=1 // loop_exit
      _
    %828 = vsyncpa [#allocation9], 1
    %s829 = scalar_lea.sflag [#allocation9], 1
    %830 = vsyncpa %s829, 1
    %831 = vsyncpa [#allocation10], 1
    %s832 = scalar_lea.sflag [#allocation10], 1
    %833 = vsyncpa %s832, 1
    %834 = vsyncpa [#allocation13], 1
    %s835 = scalar_lea.sflag [#allocation13], 1
    %836 = vsyncpa %s835, 1
  %837 = vsyncmov [#allocation4]
  %s838 = vpop.sfrf %837
  %p839 = scmp.eq.s32.totalorder %s838, 0
  %p840 = pneg %p839
  %842 = shalt.err (%p840)

</llo_original>
